<compile_context>
chip_gen: v6e
topology: v6e:2x2x1
jax: 0.10.0
libtpu: 0.0.40
codegen_flags: <defaults>
</compile_context>

<pallas_src>
import math

import jax
import jax.numpy as jnp
from jax import lax
from jax.experimental import pallas as pl
from jax.experimental.pallas import tpu as pltpu


# ----------------------------------------------------------------------------
# Deterministic weight generation (JAX port of torch generate_weights).
# TODO(synk): exact bit-match with torch.Generator(seed) RNG is not reproduced;
#             weights are generated deterministically from a JAX PRNGKey instead.
# ----------------------------------------------------------------------------
def generate_weights(in_features, out_features, key):
    if out_features == in_features:
        d = in_features
        v = jax.random.normal(key, (d, 1), dtype=jnp.float32)
        alpha = -2.0 / d
        return jnp.eye(d, dtype=jnp.float32) + alpha * (v @ v.T)
    d_long = max(out_features, in_features)
    d_tiny = min(out_features, in_features)
    ku, kv = jax.random.split(key)
    u = jax.random.normal(ku, (d_tiny, 1), dtype=jnp.float32)
    v = jax.random.normal(kv, (d_long - d_tiny, 1), dtype=jnp.float32)
    scale = math.sqrt(out_features / in_features)
    I_n = jnp.eye(d_tiny, dtype=jnp.float32) * scale
    alpha = -2.0 * scale / d_long
    upper_block = I_n + alpha * (u @ u.T)
    lower_block = alpha * (v @ u.T)
    M = jnp.concatenate([upper_block, lower_block], axis=0)   # (d_long, d_tiny)
    if out_features < in_features:
        return M.T
    return M                                                   # (out, in)


# ----------------------------------------------------------------------------
# Pallas kernel: per-tile mask apply + K-accumulated matmul, bias epilogue.
#   x_ref    : (tm, tk)  f32
#   m_ref    : (tn, tk)  f32   (M tile, (out, in) layout)
#   mask_ref : (tn, tk)  int8  (pre-binarized 0/1 — STE forward done in wrapper)
#   bias_ref : (1,  tn)  f32   (resident across i, k)
#   o_ref    : (tm, tn)  f32
#   acc_ref  : (tm, tn)  f32 VMEM scratch accumulator
# ----------------------------------------------------------------------------
def ticket_linear_kernel(x_ref, m_ref, mask_ref, bias_ref, o_ref, acc_ref):
    k = pl.program_id(2)

    @pl.when(k == 0)
    def _init():
        acc_ref[...] = jnp.zeros_like(acc_ref)

    # Per-tile mask apply (VPU work co-issues under the MXU push).
    w = mask_ref[...].astype(m_ref.dtype) * m_ref[...]          # (tn, tk) f32

    # Contract the `in` dim of both operands — no weight transpose needed.
    # bf16 operands, f32 accumulation (native MXU path).
    acc_ref[...] += lax.dot_general(
        x_ref[...].astype(jnp.bfloat16),
        w.astype(jnp.bfloat16),
        dimension_numbers=(((1,), (1,)), ((), ())),
        preferred_element_type=jnp.float32,
    )

    @pl.when(k == pl.num_programs(2) - 1)
    def _finalize():
        o_ref[...] = (acc_ref[...] + bias_ref[...]).astype(o_ref.dtype)


def _round_up(a, b):
    return (a + b - 1) // b * b


def ticket_linear(x, M, mask, bias=None, *, tm=None, tn=128, tk=256):
    """y = x @ ((mask > 0) * M).T + bias  via a tiled Pallas call.

    M, mask are (out_features, in_features); x is (batch, in_features).
    Inputs are zero-padded up to tile multiples and the result sliced back.
    """
    B, K = x.shape
    N, K2 = M.shape
    assert K == K2 and mask.shape == (N, K)
    if bias is None:
        bias = jnp.zeros((N,), dtype=jnp.float32)

    # STE forward (mask > 0) done once in the wrapper; stream as int8.
    mask_i8 = (mask > 0.0).astype(jnp.int8)

    # Tile sizes: lane-dense output (tn multiple of 128), (8,128)-aligned tiles.
    if tm is None:
        tm = min(_round_up(B, 8), 128)
    tn = min(tn, _round_up(N, 128))
    tk = min(tk, _round_up(K, 128))

    Bp, Np, Kp = _round_up(B, tm), _round_up(N, tn), _round_up(K, tk)
    x_p = jnp.pad(x.astype(jnp.float32), ((0, Bp - B), (0, Kp - K)))
    m_p = jnp.pad(M.astype(jnp.float32), ((0, Np - N), (0, Kp - K)))
    mask_p = jnp.pad(mask_i8, ((0, Np - N), (0, Kp - K)))
    bias_p = jnp.pad(bias.astype(jnp.float32), (0, Np - N)).reshape(1, Np)

    grid = (Bp // tm, Np // tn, Kp // tk)

    # Rough VMEM use: double-buffered input/output tiles + accumulator.
    vmem_est = 2 * (tm * tk * 4 + tn * tk * 4 + tn * tk * 1 + tn * 4 + tm * tn * 4) \
        + tm * tn * 4
    compiler_params = pltpu.CompilerParams(
        dimension_semantics=("parallel", "parallel", "arbitrary"),
        vmem_limit_bytes=max(2 * vmem_est, 32 * 1024 * 1024),
    )

    out = pl.pallas_call(
        ticket_linear_kernel,
        out_shape=jax.ShapeDtypeStruct((Bp, Np), jnp.float32),
        grid_spec=pltpu.PrefetchScalarGridSpec(
            num_scalar_prefetch=0,
            grid=grid,
            in_specs=[
                pl.BlockSpec((tm, tk), lambda i, j, k: (i, k)),   # x
                pl.BlockSpec((tn, tk), lambda i, j, k: (j, k)),   # M
                pl.BlockSpec((tn, tk), lambda i, j, k: (j, k)),   # mask (int8)
                pl.BlockSpec((1, tn), lambda i, j, k: (0, j)),    # bias (resident)
            ],
            out_specs=pl.BlockSpec((tm, tn), lambda i, j, k: (i, j)),
            scratch_shapes=[pltpu.VMEM((tm, tn), jnp.float32)],
        ),
        compiler_params=compiler_params,
    )(x_p, m_p, mask_p, bias_p)

    return out[:B, :N]


# ----------------------------------------------------------------------------
# Module-equivalent wrapper (parameter construction mirrors TicketLinear.__init__)
# ----------------------------------------------------------------------------
def make_ticket_linear_params(in_features, out_features, bias=True, seed=1):
    # M is regenerated each forward in torch from a fixed seed -> constant here.
    M = generate_weights(in_features, out_features, jax.random.PRNGKey(seed + 41))
    mask = jnp.ones((out_features, in_features), dtype=jnp.float32)  # nn.Parameter(torch.ones)
    b = jnp.zeros((out_features,), dtype=jnp.float32) if bias else None
    return M, mask, b


def ticket_linear_forward(x, params):
    M, mask, b = params
    # TODO(synk): STE backward (straight-through gradient) is not implemented;
    #             this is the inference/forward path only.
    return ticket_linear(x, M, mask, b)


if __name__ == "__main__":
    in_features, out_features, batch = 512, 256, 16

    key = jax.random.PRNGKey(0)
    kx, kmask = jax.random.split(key)
    x = jax.random.normal(kx, (batch, in_features), dtype=jnp.float32)

    M, mask, b = make_ticket_linear_params(in_features, out_features, bias=True, seed=1)
    # Exercise the binarize path: flip ~25% of the mask entries negative
    # (semantics identical to the module — mask is just a learnable parameter).
    mask = jnp.where(jax.random.uniform(kmask, mask.shape) < 0.25, -1.0, 1.0)
    mask = mask.astype(jnp.float32)

    y = ticket_linear(x, M, mask, b)
    y = jax.block_until_ready(y)

    # Reference in plain f32 JAX (kernel uses bf16 MXU operands w/ f32 accum,
    # hence the loosened tolerance).
    w_ref = (mask > 0.0).astype(jnp.float32) * M
    y_ref = x @ w_ref.T + b
    assert y.shape == (batch, out_features)
    assert jnp.allclose(y, y_ref, atol=5e-2, rtol=5e-2), float(jnp.abs(y - y_ref).max())

    print("KERNEL_OK")
</pallas_src>

<mosaic_0001>
module attributes {stable_mosaic.version = 11 : i64} {
  func.func @ticket_linear_kernel(%arg0: i32, %arg1: i32, %arg2: i32, %arg3: memref<16x256xf32, #tpu.memory_space<vmem>>, %arg4: memref<128x256xf32, #tpu.memory_space<vmem>>, %arg5: memref<128x256xi8, #tpu.memory_space<vmem>>, %arg6: memref<1x128xf32, #tpu.memory_space<vmem>>, %arg7: memref<16x128xf32, #tpu.memory_space<vmem>>, %arg8: memref<16x128xf32, #tpu.memory_space<vmem>>) attributes {dimension_semantics = [#tpu.dimension_semantics<parallel>, #tpu.dimension_semantics<parallel>, #tpu.dimension_semantics<arbitrary>], iteration_bounds = array<i64: 1, 2, 2>, scalar_prefetch = 0 : i64, scratch_operands = 1 : i64, tpu.core_type = #tpu.core_type<tc>, window_params = [{transform_indices = @transform_0, window_bounds = array<i64: 16, 256>}, {transform_indices = @transform_1, window_bounds = array<i64: 128, 256>}, {transform_indices = @transform_2, window_bounds = array<i64: 128, 256>}, {transform_indices = @transform_3, window_bounds = array<i64: 1, 128>}, {transform_indices = @transform_4, window_bounds = array<i64: 16, 128>}]} {
    %c0_i32 = arith.constant 0 : i32
    %0 = arith.cmpi eq, %arg2, %c0_i32 : i32
    %1 = arith.extui %0 : i1 to i32
    %c0_i32_0 = arith.constant 0 : i32
    %2 = arith.cmpi ne, %1, %c0_i32_0 : i32
    scf.if %2 {
      %cst_11 = arith.constant 0.000000e+00 : f32
      %17 = vector.broadcast %cst_11 : f32 to vector<16x128xf32>
      %c0_12 = arith.constant 0 : index
      %c0_13 = arith.constant 0 : index
      %18 = vector.load %arg8[%c0_12, %c0_13] : memref<16x128xf32, #tpu.memory_space<vmem>>, vector<16x128xf32>
      tpu.vector_store %arg8[%c0_12, %c0_13], %17 {strides = array<i32>} : memref<16x128xf32, #tpu.memory_space<vmem>>, vector<16x128xf32>,
    } else {
    }
    %c0 = arith.constant 0 : index
    %c0_1 = arith.constant 0 : index
    %3 = vector.load %arg5[%c0, %c0_1] : memref<128x256xi8, #tpu.memory_space<vmem>>, vector<128x256xi8>
    %4 = arith.sitofp %3 : vector<128x256xi8> to vector<128x256xf32>
    %c0_2 = arith.constant 0 : index
    %c0_3 = arith.constant 0 : index
    %5 = vector.load %arg4[%c0_2, %c0_3] : memref<128x256xf32, #tpu.memory_space<vmem>>, vector<128x256xf32>
    %6 = arith.mulf %4, %5 : vector<128x256xf32>
    %c0_4 = arith.constant 0 : index
    %c0_5 = arith.constant 0 : index
    %7 = vector.load %arg8[%c0_4, %c0_5] : memref<16x128xf32, #tpu.memory_space<vmem>>, vector<16x128xf32>
    %c0_6 = arith.constant 0 : index
    %c0_7 = arith.constant 0 : index
    %8 = vector.load %arg3[%c0_6, %c0_7] : memref<16x256xf32, #tpu.memory_space<vmem>>, vector<16x256xf32>
    %9 = arith.truncf %8 : vector<16x256xf32> to vector<16x256xbf16>
    %10 = arith.truncf %6 : vector<128x256xf32> to vector<128x256xbf16>
    %cst = arith.constant dense<0.000000e+00> : vector<16x128xf32>
    %11 = tpu.matmul %9, %10, %cst {dimension_numbers = #tpu.dot_dimension_numbers<[1], [1], [0], [0], [0, 0, 1, 0], [], []>} : vector<16x256xbf16>, vector<128x256xbf16>, vector<16x128xf32> -> vector<16x128xf32>
    %12 = arith.addf %7, %11 : vector<16x128xf32>
    %c0_8 = arith.constant 0 : index
    %c0_9 = arith.constant 0 : index
    %13 = vector.load %arg8[%c0_8, %c0_9] : memref<16x128xf32, #tpu.memory_space<vmem>>, vector<16x128xf32>
    tpu.vector_store %arg8[%c0_8, %c0_9], %12 {strides = array<i32>} : memref<16x128xf32, #tpu.memory_space<vmem>>, vector<16x128xf32>,
    %c1_i32 = arith.constant 1 : i32
    %14 = arith.cmpi eq, %arg2, %c1_i32 : i32
    %15 = arith.extui %14 : i1 to i32
    %c0_i32_10 = arith.constant 0 : i32
    %16 = arith.cmpi ne, %15, %c0_i32_10 : i32
    scf.if %16 {
      %c0_11 = arith.constant 0 : index
      %c0_12 = arith.constant 0 : index
      %17 = vector.load %arg8[%c0_11, %c0_12] : memref<16x128xf32, #tpu.memory_space<vmem>>, vector<16x128xf32>
      %c0_13 = arith.constant 0 : index
      %c0_14 = arith.constant 0 : index
      %18 = vector.load %arg6[%c0_13, %c0_14] : memref<1x128xf32, #tpu.memory_space<vmem>>, vector<1x128xf32>
      %19 = vector.broadcast %18 : vector<1x128xf32> to vector<16x128xf32>
      %20 = arith.addf %17, %19 : vector<16x128xf32>
      %c0_15 = arith.constant 0 : index
      %c0_16 = arith.constant 0 : index
      %21 = vector.load %arg7[%c0_15, %c0_16] : memref<16x128xf32, #tpu.memory_space<vmem>>, vector<16x128xf32>
      tpu.vector_store %arg7[%c0_15, %c0_16], %20 {strides = array<i32>} : memref<16x128xf32, #tpu.memory_space<vmem>>, vector<16x128xf32>,
    } else {
    }
    return
  }
  func.func @transform_0(%arg0: i32, %arg1: i32, %arg2: i32) -> (i32, i32) {
    %c0_i32 = arith.constant 0 : i32
    return %arg0, %arg2 : i32, i32
  }
  func.func @transform_1(%arg0: i32, %arg1: i32, %arg2: i32) -> (i32, i32) {
    %c0_i32 = arith.constant 0 : i32
    return %arg1, %arg2 : i32, i32
  }
  func.func @transform_2(%arg0: i32, %arg1: i32, %arg2: i32) -> (i32, i32) {
    %c0_i32 = arith.constant 0 : i32
    return %arg1, %arg2 : i32, i32
  }
  func.func @transform_3(%arg0: i32, %arg1: i32, %arg2: i32) -> (i32, i32) {
    %c0_i32 = arith.constant 0 : i32
    %c0_i32_0 = arith.constant 0 : i32
    return %c0_i32, %arg1 : i32, i32
  }
  func.func @transform_4(%arg0: i32, %arg1: i32, %arg2: i32) -> (i32, i32) {
    %c0_i32 = arith.constant 0 : i32
    return %arg0, %arg1 : i32, i32
  }
}

</mosaic_0001>

<llo_original>
// kernel: tpu_custom_call.1
$region0: #{tpu_custom_call.1}
  #allocation0 [shape = 'u32[]', space=smem, size = 0x4, offset = 0x4, fixed_abs, tag = 'smem constant byte address 0x4 - core index']
  #allocation1 [shape = 'u32[144,128]{1,0:T(1,128)}', space=vmem, size = 0x12000, scoped, tag = 'internal scratch']
  #allocation2 [shape = 'f32[16,128]{1,0:T(8,128)}', space=vmem, size = 0x2000, scoped, tag = 'scratch operand']
  %s0 = inlined_call_operand.hbm [shape: f32[16,512], index: 0, kind: input, shape index: {}]
  %s1 = inlined_call_operand.hbm [shape: f32[256,512], index: 1, kind: input, shape index: {}]
  %s2 = inlined_call_operand.hbm [shape: s8[256,512], index: 2, kind: input, shape index: {}]
  %s3 = inlined_call_operand.vmem [shape: f32[1,256], index: 3, kind: input, shape index: {}]
  %s4 = inlined_call_operand.hbm [shape: f32[16,256], index: 4, kind: output, shape index: {}]
  %s5 = sld [smem:[#allocation0]]
  $region69: #{tpu_custom_call.1} parent=0
    _
  %s7 = ssub.s32 1, %s5
  %s8 = scalar_select 0, %s7, %s5
  $region1: #{tpu_custom_call.1} parent=0
    #allocation3 [shape = 'u8[32768]{0}', space=vmem, size = 0x8000, scoped, tag = 'input window, operand 0']
    #allocation4 [shape = 's32[2]{0}', space=sflag, size = 0x8, scoped, tag = 'scoped memory for tpu_custom_call.1']
    #allocation5 [shape = 's32[2]{0}', space=sflag, size = 0x8, scoped, tag = 'scoped memory for tpu_custom_call.1']
    #allocation6 [shape = 'u8[262144]{0}', space=vmem, size = 0x40000, scoped, tag = 'input window, operand 1']
    #allocation7 [shape = 's32[2]{0}', space=sflag, size = 0x8, scoped, tag = 'scoped memory for tpu_custom_call.1']
    #allocation8 [shape = 'u8[65536]{0}', space=vmem, size = 0x10000, scoped, tag = 'input window, operand 2']
    #allocation9 [shape = 'u8[16384]{0}', space=vmem, size = 0x4000, scoped, tag = 'output window, operand 0']
    %9 = vsyncpa [#allocation4], 0
    %s10 = scalar_lea.sflag [#allocation4], 1
    %11 = vsyncpa %s10, 0
    %12 = vsyncpa [#allocation7], 0
    %s13 = scalar_lea.sflag [#allocation7], 1
    %14 = vsyncpa %s13, 0
    %15 = vsyncpa [#allocation5], 0
    %s16 = scalar_lea.sflag [#allocation5], 1
    %17 = vsyncpa %s16, 0
    loop: start=0, step=1, limit=6
    $region2: #{tpu_custom_call.1} parent=1 // loop_pre_header
      _
    $region3: #{tpu_custom_call.1} parent=1 // loop_header
      %s19 = sphi 0, %s23
      %p20 = scmp.ge.s32.totalorder %s19, 6
      %s26 = sphi 0, %s45
      %s27 = sphi 0, %s41
      %s28 = sphi 0, %s37
      %s29 = sphi 0, %s26
      %s30 = sphi 0, %s27
      %s31 = sphi 0, %s28
      %s32 = sphi 0, %s29
      %s33 = sphi 0, %s30
      %s34 = sphi 0, %s31
      %s50 = sphi 0, %s52
      %s53 = sphi 0, %s50
      %s54 = sphi 0, %s53
      %s70 = sphi 0, %s54
      %s78 = sphi 0, %s80
      %s81 = sphi 0, %s78
      %s82 = sphi 0, %s81
      %s98 = sphi 0, %s82
      %s106 = sphi 0, %s108
      %s109 = sphi 0, %s106
      %s110 = sphi 0, %s109
      %s126 = sphi 0, %s110
      %s132 = sphi 0, %s134
      %s135 = sphi 0, %s132
      %s136 = sphi 0, %s135
      %s152 = sphi 0, %s136
      %s160 = sphi 0, %s162
      %s163 = sphi 0, %s160
      %s164 = sphi 0, %s163
      %s180 = sphi 0, %s164
    $region4: #{tpu_custom_call.1} parent=1 // loop_header_branch
      %22 = sbr.rel (%p20) target = $region8
    $region5: #{tpu_custom_call.1} parent=1 // loop_body
      %s24 = ssub.s32 %s19, 1
      %s25 = ssub.s32 %s19, 2
      %s35 = sadd.s32 1, %s28
      %p36 = scmp.ge.s32.totalorder %s35, 2
      %s37 = scalar_select %p36, 0, %s35
      %s38 = sadd.s32 1, %s27
      %s39 = scalar_select %p36, %s38, %s27
      %p40 = scmp.ge.s32.totalorder %s39, 2
      %s41 = scalar_select %p40, 0, %s39
      %s42 = sadd.s32 1, %s26
      %s43 = scalar_select %p40, %s42, %s26
      %p44 = scmp.ge.s32.totalorder %s43, 1
      %s45 = scalar_select %p44, 0, %s43
      %s46 = ssub.s32 %s26, %s45
      %s47 = ssub.s32 %s28, %s37
      %s48 = sor.u32 %s46, %s47
      %p49 = scmp.eq.s32.totalorder %s48, 0
      %s51 = sadd.s32 %s50, 1
      %s52 = scalar_select %p49, %s50, %s51
      %p55 = pneg %p49
      %p56 = scmp.eq.s32.totalorder %s19, 3
      %p57 = por %p55, %p56
      %p58 = scmp.ne.s32.totalorder %s50, %s53
      %p59 = scmp.eq.s32.totalorder %s19, 0
      %p60 = por %p58, %p59
      %p61 = scmp.ne.s32.totalorder %s50, %s53
      %p62 = scmp.eq.s32.totalorder %s24, 3
      %p63 = por %p61, %p62
      %p64 = scmp.ne.s32.totalorder %s53, %s54
      %p65 = scmp.eq.s32.totalorder %s24, 0
      %p66 = por %p64, %p65
      %p67 = scmp.ne.s32.totalorder %s53, %s54
      %p68 = scmp.eq.s32.totalorder %s25, 3
      %p69 = por %p67, %p68
      %p71 = scmp.ne.s32.totalorder %s54, %s70
      %p72 = scmp.eq.s32.totalorder %s25, 0
      %p73 = por %p71, %p72
      %s74 = ssub.s32 %s27, %s41
      %s75 = ssub.s32 %s28, %s37
      %s76 = sor.u32 %s74, %s75
      %p77 = scmp.eq.s32.totalorder %s76, 0
      %s79 = sadd.s32 %s78, 1
      %s80 = scalar_select %p77, %s78, %s79
      %p83 = pneg %p77
      %p84 = scmp.eq.s32.totalorder %s19, 3
      %p85 = por %p83, %p84
      %p86 = scmp.ne.s32.totalorder %s78, %s81
      %p87 = scmp.eq.s32.totalorder %s19, 0
      %p88 = por %p86, %p87
      %p89 = scmp.ne.s32.totalorder %s78, %s81
      %p90 = scmp.eq.s32.totalorder %s24, 3
      %p91 = por %p89, %p90
      %p92 = scmp.ne.s32.totalorder %s81, %s82
      %p93 = scmp.eq.s32.totalorder %s24, 0
      %p94 = por %p92, %p93
      %p95 = scmp.ne.s32.totalorder %s81, %s82
      %p96 = scmp.eq.s32.totalorder %s25, 3
      %p97 = por %p95, %p96
      %p99 = scmp.ne.s32.totalorder %s82, %s98
      %p100 = scmp.eq.s32.totalorder %s25, 0
      %p101 = por %p99, %p100
      %s102 = ssub.s32 %s27, %s41
      %s103 = ssub.s32 %s28, %s37
      %s104 = sor.u32 %s102, %s103
      %p105 = scmp.eq.s32.totalorder %s104, 0
      %s107 = sadd.s32 %s106, 1
      %s108 = scalar_select %p105, %s106, %s107
      %p111 = pneg %p105
      %p112 = scmp.eq.s32.totalorder %s19, 3
      %p113 = por %p111, %p112
      %p114 = scmp.ne.s32.totalorder %s106, %s109
      %p115 = scmp.eq.s32.totalorder %s19, 0
      %p116 = por %p114, %p115
      %p117 = scmp.ne.s32.totalorder %s106, %s109
      %p118 = scmp.eq.s32.totalorder %s24, 3
      %p119 = por %p117, %p118
      %p120 = scmp.ne.s32.totalorder %s109, %s110
      %p121 = scmp.eq.s32.totalorder %s24, 0
      %p122 = por %p120, %p121
      %p123 = scmp.ne.s32.totalorder %s109, %s110
      %p124 = scmp.eq.s32.totalorder %s25, 3
      %p125 = por %p123, %p124
      %p127 = scmp.ne.s32.totalorder %s110, %s126
      %p128 = scmp.eq.s32.totalorder %s25, 0
      %p129 = por %p127, %p128
      %s130 = ssub.s32 %s27, %s41
      %p131 = scmp.eq.s32.totalorder %s130, 0
      %s133 = sadd.s32 %s132, 1
      %s134 = scalar_select %p131, %s132, %s133
      %p137 = pneg %p131
      %p138 = scmp.eq.s32.totalorder %s19, 3
      %p139 = por %p137, %p138
      %p140 = scmp.ne.s32.totalorder %s132, %s135
      %p141 = scmp.eq.s32.totalorder %s19, 0
      %p142 = por %p140, %p141
      %p143 = scmp.ne.s32.totalorder %s132, %s135
      %p144 = scmp.eq.s32.totalorder %s24, 3
      %p145 = por %p143, %p144
      %p146 = scmp.ne.s32.totalorder %s135, %s136
      %p147 = scmp.eq.s32.totalorder %s24, 0
      %p148 = por %p146, %p147
      %p149 = scmp.ne.s32.totalorder %s135, %s136
      %p150 = scmp.eq.s32.totalorder %s25, 3
      %p151 = por %p149, %p150
      %p153 = scmp.ne.s32.totalorder %s136, %s152
      %p154 = scmp.eq.s32.totalorder %s25, 0
      %p155 = por %p153, %p154
      %s156 = ssub.s32 %s26, %s45
      %s157 = ssub.s32 %s27, %s41
      %s158 = sor.u32 %s156, %s157
      %p159 = scmp.eq.s32.totalorder %s158, 0
      %s161 = sadd.s32 %s160, 1
      %s162 = scalar_select %p159, %s160, %s161
      %p165 = pneg %p159
      %p166 = scmp.eq.s32.totalorder %s19, 3
      %p167 = por %p165, %p166
      %p168 = scmp.ne.s32.totalorder %s160, %s163
      %p169 = scmp.eq.s32.totalorder %s19, 0
      %p170 = por %p168, %p169
      %p171 = scmp.ne.s32.totalorder %s160, %s163
      %p172 = scmp.eq.s32.totalorder %s24, 3
      %p173 = por %p171, %p172
      %p174 = scmp.ne.s32.totalorder %s163, %s164
      %p175 = scmp.eq.s32.totalorder %s24, 0
      %p176 = por %p174, %p175
      %p177 = scmp.ne.s32.totalorder %s163, %s164
      %p178 = scmp.eq.s32.totalorder %s25, 3
      %p179 = por %p177, %p178
      %p181 = scmp.ne.s32.totalorder %s164, %s180
      %p182 = scmp.eq.s32.totalorder %s25, 0
      %p183 = por %p181, %p182
      %p184 = scmp.le.s32.totalorder 1, %s19
      %p185 = scmp.lt.s32.totalorder %s19, 5
      %p186 = pnand %p184, %p185
      %p187 = pneg %p186
      // Predicated region
      $region9: #{tpu_custom_call.1} parent=5 // pred_check
        _
      $region10: #{tpu_custom_call.1} parent=5 // pred_check_branch
        %189 = sbr.rel (%p186) target = $region12
      $region11: #{tpu_custom_call.1} parent=5 // pred_region
        %s190 = ssub.s32 %s19, 1
      $region12: #{tpu_custom_call.1} parent=5 // pred_fallthru
        _
      %p191 = scmp.lt.s32.totalorder %s19, 4
      // Predicated region
      $region13: #{tpu_custom_call.1} parent=5 // pred_check
        %p192 = pneg %p191
      $region14: #{tpu_custom_call.1} parent=5 // pred_check_branch
        %194 = sbr.rel (%p192) target = $region16
      $region15: #{tpu_custom_call.1} parent=5 // pred_region
        // Predicated region
        $region17: #{tpu_custom_call.1} parent=15 // pred_check
          %p195 = pneg %p60
        $region18: #{tpu_custom_call.1} parent=15 // pred_check_branch
          %197 = sbr.rel (%p195) target = $region20
        $region19: #{tpu_custom_call.1} parent=15 // pred_region
          %s198 = sand.u32 %s50, 1
          %s199 = scalar_lea.sflag [#allocation4], %s198
          %s200 = sand.u32 %s50, 1
          %s201 = smul.addr %s200, 32
          %s202 = scalar_lea.vmem [#allocation3], %s201
          %s203 = smul.u32 2, %s26
          %s204 = smul.u32 2, %s28
          %s206 = ssub.s32 512, 512
          %207 = vsyncadd %s199, %s206
          %s208 = smul.addr %s203, 4
          %s209 = sadd.s32 %s204, %s208
          %s210 = smul.addr %s209, 128
          %s211 = scalar_lea.hbm %s0, %s210
          %s212 = sshll.u32 %s202, 4
          %s213 = int_to_ptr.vmem [resolvable:$true] %s212
          %218 = dma.hbm_to_vmem [thread:$0]  %s211, 512, %s213, %s199, 512, 256, 16
        $region20: #{tpu_custom_call.1} parent=15 // pred_fallthru
          _
        // Predicated region
        $region21: #{tpu_custom_call.1} parent=15 // pred_check
          %p219 = pneg %p88
        $region22: #{tpu_custom_call.1} parent=15 // pred_check_branch
          %221 = sbr.rel (%p219) target = $region24
        $region23: #{tpu_custom_call.1} parent=15 // pred_region
          %s222 = sand.u32 %s19, 1
          %s223 = scalar_lea.sflag [#allocation7], %s222
          %s224 = sand.u32 %s78, 1
          %s225 = smul.addr %s224, 256
          %s226 = scalar_lea.vmem [#allocation6], %s225
          %s227 = smul.u32 16, %s27
          %s228 = smul.u32 2, %s28
          %s230 = ssub.s32 4096, 4096
          %231 = vsyncadd %s223, %s230
          %s232 = smul.addr %s227, 4
          %s233 = sadd.s32 %s228, %s232
          %s234 = smul.addr %s233, 128
          %s235 = scalar_lea.hbm %s1, %s234
          %s236 = sshll.u32 %s226, 4
          %s237 = int_to_ptr.vmem [resolvable:$true] %s236
          %242 = dma.hbm_to_vmem [thread:$0]  %s235, 4096, %s237, %s223, 512, 256, 16
        $region24: #{tpu_custom_call.1} parent=15 // pred_fallthru
          _
        // Predicated region
        $region25: #{tpu_custom_call.1} parent=15 // pred_check
          %p243 = pneg %p116
        $region26: #{tpu_custom_call.1} parent=15 // pred_check_branch
          %245 = sbr.rel (%p243) target = $region28
        $region27: #{tpu_custom_call.1} parent=15 // pred_region
          %s246 = sand.u32 %s19, 1
          %s247 = scalar_lea.sflag [#allocation7], %s246
          %s248 = sand.u32 %s106, 1
          %s249 = smul.addr %s248, 64
          %s250 = scalar_lea.vmem [#allocation8], %s249
          %s251 = smul.u32 4, %s27
          %s252 = smul.u32 2, %s28
          %s254 = ssub.s32 1024, 1024
          %255 = vsyncadd %s247, %s254
          %s256 = smul.addr %s251, 4
          %s257 = sadd.s32 %s252, %s256
          %s258 = smul.addr %s257, 128
          %s259 = scalar_lea.hbm %s2, %s258
          %s260 = sshll.u32 %s250, 4
          %s261 = int_to_ptr.vmem [resolvable:$true] %s260
          %266 = dma.hbm_to_vmem [thread:$0]  %s259, 1024, %s261, %s247, 512, 256, 16
        $region28: #{tpu_custom_call.1} parent=15 // pred_fallthru
          _
        // Predicated region
        $region29: #{tpu_custom_call.1} parent=15 // pred_check
          %p267 = pneg %p142
        $region30: #{tpu_custom_call.1} parent=15 // pred_check_branch
          %269 = sbr.rel (%p267) target = $region32
        $region31: #{tpu_custom_call.1} parent=15 // pred_region
          %p270 = scmp.lt.s32.totalorder %s27, 1
          %s271 = scalar_select %p270, %s27, 1
          %s272 = scalar_lea.vmem %s3, %s271
        $region32: #{tpu_custom_call.1} parent=15 // pred_fallthru
          _
      $region16: #{tpu_custom_call.1} parent=5 // pred_fallthru
        _
      %p273 = scmp.le.s32.totalorder 1, %s19
      %p274 = scmp.lt.s32.totalorder %s19, 5
      %p275 = pnand %p273, %p274
      %p276 = pneg %p275
      // Predicated region
      $region33: #{tpu_custom_call.1} parent=5 // pred_check
        _
      $region34: #{tpu_custom_call.1} parent=5 // pred_check_branch
        %278 = sbr.rel (%p275) target = $region36
      $region35: #{tpu_custom_call.1} parent=5 // pred_region
        %s279 = ssub.s32 %s19, 1
        %s280 = sand.u32 %s53, 1
        %s281 = scalar_lea.sflag [#allocation4], %s280
        %s282 = sand.u32 %s53, 1
        %s283 = smul.addr %s282, 32
        %s284 = scalar_lea.vmem [#allocation3], %s283
        // Predicated region
        $region37: #{tpu_custom_call.1} parent=35 // pred_check
          %p285 = pneg %p66
        $region38: #{tpu_custom_call.1} parent=35 // pred_check_branch
          %287 = sbr.rel (%p285) target = $region40
        $region39: #{tpu_custom_call.1} parent=35 // pred_region
          %288 = dma.done %s281, 512
        $region40: #{tpu_custom_call.1} parent=35 // pred_fallthru
          _
        %s289 = sand.u32 %s24, 1
        %s290 = scalar_lea.sflag [#allocation7], %s289
        %s291 = sand.u32 %s81, 1
        %s292 = smul.addr %s291, 256
        %s293 = scalar_lea.vmem [#allocation6], %s292
        // Predicated region
        $region41: #{tpu_custom_call.1} parent=35 // pred_check
          %p294 = pneg %p94
        $region42: #{tpu_custom_call.1} parent=35 // pred_check_branch
          %296 = sbr.rel (%p294) target = $region44
        $region43: #{tpu_custom_call.1} parent=35 // pred_region
          %297 = dma.done %s290, 4096
        $region44: #{tpu_custom_call.1} parent=35 // pred_fallthru
          _
        %s298 = sand.u32 %s24, 1
        %s299 = scalar_lea.sflag [#allocation7], %s298
        %s300 = sand.u32 %s109, 1
        %s301 = smul.addr %s300, 64
        %s302 = scalar_lea.vmem [#allocation8], %s301
        // Predicated region
        $region45: #{tpu_custom_call.1} parent=35 // pred_check
          %p303 = pneg %p122
        $region46: #{tpu_custom_call.1} parent=35 // pred_check_branch
          %305 = sbr.rel (%p303) target = $region48
        $region47: #{tpu_custom_call.1} parent=35 // pred_region
          %306 = dma.done %s299, 1024
        $region48: #{tpu_custom_call.1} parent=35 // pred_fallthru
          _
        %s307 = sand.u32 %s53, 1
        %s308 = scalar_lea.sflag [#allocation4], %s307
        %s309 = sand.u32 %s53, 1
        %s310 = smul.addr %s309, 32
        %s311 = scalar_lea.vmem [#allocation3], %s310
        %p312 = pneg %p66
        %p313 = pneg %p63
        %s314 = sand.u32 %s24, 1
        %s315 = scalar_lea.sflag [#allocation7], %s314
        %s316 = sand.u32 %s81, 1
        %s317 = smul.addr %s316, 256
        %s318 = scalar_lea.vmem [#allocation6], %s317
        %p319 = pneg %p94
        %p320 = pneg %p91
        %s321 = sand.u32 %s24, 1
        %s322 = scalar_lea.sflag [#allocation7], %s321
        %s323 = sand.u32 %s109, 1
        %s324 = smul.addr %s323, 64
        %s325 = scalar_lea.vmem [#allocation8], %s324
        %p326 = pneg %p122
        %p327 = pneg %p119
        %p328 = scmp.lt.s32.totalorder %s30, 1
        %s329 = scalar_select %p328, %s30, 1
        %s330 = scalar_lea.vmem %s3, %s329
        %p331 = pneg %p148
        %p332 = pneg %p145
        %p333 = pneg %p176
        %p334 = pneg %p173
        %s335 = sand.u32 %s163, 1
        %s336 = scalar_lea.sflag [#allocation5], %s335
        %s337 = sand.u32 %s163, 1
        %s338 = smul.addr %s337, 16
        %s339 = scalar_lea.vmem [#allocation9], %s338
        %s340 = smul.u32 2, %s29
        %s341 = smul.u32 2, %s31
        %s342 = smul.u32 16, %s30
        %s343 = smul.u32 2, %s31
        %s344 = smul.u32 4, %s30
        %s345 = smul.u32 2, %s31
        %p346 = scmp.lt.s32.totalorder %s30, 1
        %s347 = scalar_select %p346, %s30, 1
        %s348 = scalar_lea.vmem %s3, %s347
        %s349 = smul.u32 2, %s29
        %p351 = scmp.eq.s32.totalorder %s31, 0
        // Predicated region
        $region49: #{tpu_custom_call.1} parent=35 // pred_check
          %p352 = pneg %p351
        $region50: #{tpu_custom_call.1} parent=35 // pred_check_branch
          %354 = sbr.rel (%p352) target = $region52
        $region51: #{tpu_custom_call.1} parent=35 // pred_region
          %355 = vst [vmem:[#allocation2] sm:$0xff] 0.0
          %356 = vst [vmem:[#allocation2 + $0x8] sm:$0xff] 0.0
        $region52: #{tpu_custom_call.1} parent=35 // pred_fallthru
          _
        %v357 = vld [vmem:[%s302] sm:$0xff]
        %v358 = vld [vmem:[%s302 + $0x8] sm:$0xff]
        %v359 = vld [vmem:[%s302 + $0x10] sm:$0xff]
        %v360 = vld [vmem:[%s302 + $0x18] sm:$0xff]
        %v361 = vld [vmem:[%s302 + $0x20] sm:$0xff]
        %v362 = vld [vmem:[%s302 + $0x28] sm:$0xff]
        %v363 = vld [vmem:[%s302 + $0x30] sm:$0xff]
        %v364 = vld [vmem:[%s302 + $0x38] sm:$0xff]
        %v365 = vunpack.c.0.s8 %v357
        %v366 = vunpack.c.0.s8 %v358
        %v367 = vunpack.c.1.s8 %v357
        %v368 = vunpack.c.1.s8 %v358
        %v369 = vunpack.c.2.s8 %v357
        %v370 = vunpack.c.2.s8 %v358
        %v371 = vunpack.c.3.s8 %v357
        %v372 = vunpack.c.3.s8 %v358
        %v373 = vunpack.c.0.s8 %v359
        %v374 = vunpack.c.0.s8 %v360
        %v375 = vunpack.c.1.s8 %v359
        %v376 = vunpack.c.1.s8 %v360
        %v377 = vunpack.c.2.s8 %v359
        %v378 = vunpack.c.2.s8 %v360
        %v379 = vunpack.c.3.s8 %v359
        %v380 = vunpack.c.3.s8 %v360
        %v381 = vunpack.c.0.s8 %v361
        %v382 = vunpack.c.0.s8 %v362
        %v383 = vunpack.c.1.s8 %v361
        %v384 = vunpack.c.1.s8 %v362
        %v385 = vunpack.c.2.s8 %v361
        %v386 = vunpack.c.2.s8 %v362
        %v387 = vunpack.c.3.s8 %v361
        %v388 = vunpack.c.3.s8 %v362
        %v389 = vunpack.c.0.s8 %v363
        %v390 = vunpack.c.0.s8 %v364
        %v391 = vunpack.c.1.s8 %v363
        %v392 = vunpack.c.1.s8 %v364
        %v393 = vunpack.c.2.s8 %v363
        %v394 = vunpack.c.2.s8 %v364
        %v395 = vunpack.c.3.s8 %v363
        %v396 = vunpack.c.3.s8 %v364
        %v397 = vcvt.s32.f32 %v365
        %v398 = vcvt.s32.f32 %v366
        %v399 = vcvt.s32.f32 %v367
        %v400 = vcvt.s32.f32 %v368
        %v401 = vcvt.s32.f32 %v369
        %v402 = vcvt.s32.f32 %v370
        %v403 = vcvt.s32.f32 %v371
        %v404 = vcvt.s32.f32 %v372
        %v405 = vcvt.s32.f32 %v373
        %v406 = vcvt.s32.f32 %v374
        %v407 = vcvt.s32.f32 %v375
        %v408 = vcvt.s32.f32 %v376
        %v409 = vcvt.s32.f32 %v377
        %v410 = vcvt.s32.f32 %v378
        %v411 = vcvt.s32.f32 %v379
        %v412 = vcvt.s32.f32 %v380
        %v413 = vcvt.s32.f32 %v381
        %v414 = vcvt.s32.f32 %v382
        %v415 = vcvt.s32.f32 %v383
        %v416 = vcvt.s32.f32 %v384
        %v417 = vcvt.s32.f32 %v385
        %v418 = vcvt.s32.f32 %v386
        %v419 = vcvt.s32.f32 %v387
        %v420 = vcvt.s32.f32 %v388
        %v421 = vcvt.s32.f32 %v389
        %v422 = vcvt.s32.f32 %v390
        %v423 = vcvt.s32.f32 %v391
        %v424 = vcvt.s32.f32 %v392
        %v425 = vcvt.s32.f32 %v393
        %v426 = vcvt.s32.f32 %v394
        %v427 = vcvt.s32.f32 %v395
        %v428 = vcvt.s32.f32 %v396
        %v429 = vld [vmem:[%s293] sm:$0xff]
        %v430 = vld [vmem:[%s293 + $0x8] sm:$0xff]
        %v431 = vld [vmem:[%s293 + $0x10] sm:$0xff]
        %v432 = vld [vmem:[%s293 + $0x18] sm:$0xff]
        %v433 = vld [vmem:[%s293 + $0x20] sm:$0xff]
        %v434 = vld [vmem:[%s293 + $0x28] sm:$0xff]
        %v435 = vld [vmem:[%s293 + $0x30] sm:$0xff]
        %v436 = vld [vmem:[%s293 + $0x38] sm:$0xff]
        %v437 = vld [vmem:[%s293 + $0x40] sm:$0xff]
        %v438 = vld [vmem:[%s293 + $0x48] sm:$0xff]
        %v439 = vld [vmem:[%s293 + $0x50] sm:$0xff]
        %v440 = vld [vmem:[%s293 + $0x58] sm:$0xff]
        %v441 = vld [vmem:[%s293 + $0x60] sm:$0xff]
        %v442 = vld [vmem:[%s293 + $0x68] sm:$0xff]
        %v443 = vld [vmem:[%s293 + $0x70] sm:$0xff]
        %v444 = vld [vmem:[%s293 + $0x78] sm:$0xff]
        %v445 = vld [vmem:[%s293 + $0x80] sm:$0xff]
        %v446 = vld [vmem:[%s293 + $0x88] sm:$0xff]
        %v447 = vld [vmem:[%s293 + $0x90] sm:$0xff]
        %v448 = vld [vmem:[%s293 + $0x98] sm:$0xff]
        %v449 = vld [vmem:[%s293 + $0xa0] sm:$0xff]
        %v450 = vld [vmem:[%s293 + $0xa8] sm:$0xff]
        %v451 = vld [vmem:[%s293 + $0xb0] sm:$0xff]
        %v452 = vld [vmem:[%s293 + $0xb8] sm:$0xff]
        %v453 = vld [vmem:[%s293 + $0xc0] sm:$0xff]
        %v454 = vld [vmem:[%s293 + $0xc8] sm:$0xff]
        %v455 = vld [vmem:[%s293 + $0xd0] sm:$0xff]
        %v456 = vld [vmem:[%s293 + $0xd8] sm:$0xff]
        %v457 = vld [vmem:[%s293 + $0xe0] sm:$0xff]
        %v458 = vld [vmem:[%s293 + $0xe8] sm:$0xff]
        %v459 = vld [vmem:[%s293 + $0xf0] sm:$0xff]
        %v460 = vld [vmem:[%s293 + $0xf8] sm:$0xff]
        %v461 = vmul.f32 %v397, %v429
        %v462 = vmul.f32 %v398, %v430
        %v463 = vmul.f32 %v399, %v431
        %v464 = vmul.f32 %v400, %v432
        %v465 = vmul.f32 %v401, %v433
        %v466 = vmul.f32 %v402, %v434
        %v467 = vmul.f32 %v403, %v435
        %v468 = vmul.f32 %v404, %v436
        %v469 = vmul.f32 %v405, %v437
        %v470 = vmul.f32 %v406, %v438
        %v471 = vmul.f32 %v407, %v439
        %v472 = vmul.f32 %v408, %v440
        %v473 = vmul.f32 %v409, %v441
        %v474 = vmul.f32 %v410, %v442
        %v475 = vmul.f32 %v411, %v443
        %v476 = vmul.f32 %v412, %v444
        %v477 = vmul.f32 %v413, %v445
        %v478 = vmul.f32 %v414, %v446
        %v479 = vmul.f32 %v415, %v447
        %v480 = vmul.f32 %v416, %v448
        %v481 = vmul.f32 %v417, %v449
        %v482 = vmul.f32 %v418, %v450
        %v483 = vmul.f32 %v419, %v451
        %v484 = vmul.f32 %v420, %v452
        %v485 = vmul.f32 %v421, %v453
        %v486 = vmul.f32 %v422, %v454
        %v487 = vmul.f32 %v423, %v455
        %v488 = vmul.f32 %v424, %v456
        %v489 = vmul.f32 %v425, %v457
        %v490 = vmul.f32 %v426, %v458
        %v491 = vmul.f32 %v427, %v459
        %v492 = vmul.f32 %v428, %v460
        %v493 = vld [vmem:[#allocation2] sm:$0xff]
        %v494 = vld [vmem:[#allocation2 + $0x8] sm:$0xff]
        %v495 = vld [vmem:[%s284] sm:$0xff]
        %v496 = vld [vmem:[%s284 + $0x8] sm:$0xff]
        %v497 = vld [vmem:[%s284 + $0x10] sm:$0xff]
        %v498 = vld [vmem:[%s284 + $0x18] sm:$0xff]
        %v499 = vpack.c.bf16 %v497, %v495
        %v500 = vpack.c.bf16 %v498, %v496
        %v501 = vpack.c.bf16 %v463, %v461
        %v502 = vpack.c.bf16 %v464, %v462
        %v503 = vpack.c.bf16 %v467, %v465
        %v504 = vpack.c.bf16 %v468, %v466
        %v505 = vpack.c.bf16 %v471, %v469
        %v506 = vpack.c.bf16 %v472, %v470
        %v507 = vpack.c.bf16 %v475, %v473
        %v508 = vpack.c.bf16 %v476, %v474
        %v509 = vpack.c.bf16 %v479, %v477
        %v510 = vpack.c.bf16 %v480, %v478
        %v511 = vpack.c.bf16 %v483, %v481
        %v512 = vpack.c.bf16 %v484, %v482
        %v513 = vpack.c.bf16 %v487, %v485
        %v514 = vpack.c.bf16 %v488, %v486
        %v515 = vpack.c.bf16 %v491, %v489
        %v516 = vpack.c.bf16 %v492, %v490
        %517 = vmatprep.subr.bf16.mxu0 %v516
        %518 = vmatpush1.bf16.xpose.msra.mxu0 %v515
        %519 = vmatprep.subr.bf16.mxu0 %v514
        %520 = vmatpush1.bf16.xpose.msra.mxu0 %v513
        %521 = vmatprep.subr.bf16.mxu0 %v512
        %522 = vmatpush1.bf16.xpose.msra.mxu0 %v511
        %523 = vmatprep.subr.bf16.mxu0 %v510
        %524 = vmatpush1.bf16.xpose.msra.mxu0 %v509
        %525 = vmatprep.subr.bf16.mxu0 %v508
        %526 = vmatpush1.bf16.xpose.msra.mxu0 %v507
        %527 = vmatprep.subr.bf16.mxu0 %v506
        %528 = vmatpush1.bf16.xpose.msra.mxu0 %v505
        %529 = vmatprep.subr.bf16.mxu0 %v504
        %530 = vmatpush1.bf16.xpose.msra.mxu0 %v503
        %531 = vmatprep.subr.bf16.mxu0 %v502
        %532 = vmatpush1.bf16.xpose.msra.mxu0 %v501
        %533 = vmatprep.subr.bf16.mxu0 0
        %534 = vmatpush2.bf16.xpose.msra.mxu0 0
        %535 = vmatprep.subr.bf16.mxu0 0
        %536 = vmatpush2.bf16.xpose.msra.mxu0 0
        %537 = vmatprep.subr.bf16.mxu0 0
        %538 = vmatpush2.bf16.xpose.msra.mxu0 0
        %539 = vmatprep.subr.bf16.mxu0 0
        %540 = vmatpush2.bf16.xpose.msra.mxu0 0
        %541 = vmatprep.subr.bf16.mxu0 0
        %542 = vmatpush2.bf16.xpose.msra.mxu0 0
        %543 = vmatprep.subr.bf16.mxu0 0
        %544 = vmatpush2.bf16.xpose.msra.mxu0 0
        %545 = vmatprep.subr.bf16.mxu0 0
        %546 = vmatpush2.bf16.xpose.msra.mxu0 0
        %547 = vmatprep.subr.bf16.mxu0 0
        %548 = vmatpush2.bf16.xpose.msra.mxu0 0
        %549 = vmatprep.mubr.bf16.mxu0 %v500
        %550 = vmatmul.mubr.bf16.gmra.mxu0 %v499
        %v551 = vpop.f32.mrf.mxu0
        %v552 = vadd.f32 0.0, %v551
        %v553 = vpop.f32.mrf.mxu0
        %v554 = vpop.f32.mrf.mxu0
        %v555 = vadd.f32 0.0, %v554
        %v556 = vpop.f32.mrf.mxu0
        %557 = vdwg.mxu0
        %v558 = vadd.f32 %v493, %v552
        %v559 = vadd.f32 %v494, %v555
        %560 = vst [vmem:[#allocation2] sm:$0xff] %v558
        %561 = vst [vmem:[#allocation2 + $0x8] sm:$0xff] %v559
        %p562 = scmp.eq.s32.totalorder %s31, 1
        // Predicated region
        $region53: #{tpu_custom_call.1} parent=35 // pred_check
          %p563 = pneg %p562
        $region54: #{tpu_custom_call.1} parent=35 // pred_check_branch
          %565 = sbr.rel (%p563) target = $region56
        $region55: #{tpu_custom_call.1} parent=35 // pred_region
          %v566 = vld [vmem:[#allocation2] sm:$0xff]
          %v567 = vld [vmem:[#allocation2 + $0x8] sm:$0xff]
          %v568 = vld [vmem:[%s348] sm:$0x1]
          %v570 = vlaneseq
          %v571 = vshrl.u32 %v570, 7
          %v572 = vsub.s32 0, %v571
          %v573 = vrot.slane %v568, %v572
          %v575 = vadd.f32 %v566, %v573
          %v576 = vadd.f32 %v567, %v573
          %577 = vst [vmem:[%s339] sm:$0xff] %v575
          %578 = vst [vmem:[%s339 + $0x8] sm:$0xff] %v576
        $region56: #{tpu_custom_call.1} parent=35 // pred_fallthru
          _
        %s579 = sand.u32 %s163, 1
        %s580 = scalar_lea.sflag [#allocation5], %s579
        %s581 = sand.u32 %s163, 1
        %s582 = smul.addr %s581, 16
        %s583 = scalar_lea.vmem [#allocation9], %s582
        // Predicated region
        $region57: #{tpu_custom_call.1} parent=35 // pred_check
          %p584 = pneg %p173
        $region58: #{tpu_custom_call.1} parent=35 // pred_check_branch
          %586 = sbr.rel (%p584) target = $region60
        $region59: #{tpu_custom_call.1} parent=35 // pred_region
          %s587 = smul.u32 2, %s29
          %s589 = ssub.s32 256, 256
          %590 = vsyncadd %s580, %s589
          %s591 = smul.addr %s587, 2
          %s592 = sadd.s32 %s30, %s591
          %s593 = smul.addr %s592, 128
          %s594 = scalar_lea.hbm %s4, %s593
          %s595 = sshll.u32 %s583, 4
          %s596 = int_to_ptr.vmem [resolvable:$true] %s595
          %601 = dma.vmem_to_hbm [thread:$0]  %s596, 256, %s594, %s580, 128, 256, 8
        $region60: #{tpu_custom_call.1} parent=35 // pred_fallthru
          _
      $region36: #{tpu_custom_call.1} parent=5 // pred_fallthru
        _
      %p602 = scmp.le.s32.totalorder 2, %s19
      // Predicated region
      $region61: #{tpu_custom_call.1} parent=5 // pred_check
        %p603 = pneg %p602
      $region62: #{tpu_custom_call.1} parent=5 // pred_check_branch
        %605 = sbr.rel (%p603) target = $region64
      $region63: #{tpu_custom_call.1} parent=5 // pred_region
        %s606 = ssub.s32 %s19, 2
        // Predicated region
        $region65: #{tpu_custom_call.1} parent=63 // pred_check
          %p607 = pneg %p179
        $region66: #{tpu_custom_call.1} parent=63 // pred_check_branch
          %609 = sbr.rel (%p607) target = $region68
        $region67: #{tpu_custom_call.1} parent=63 // pred_region
          %s610 = sand.u32 %s164, 1
          %s611 = scalar_lea.sflag [#allocation5], %s610
          %s612 = sand.u32 %s164, 1
          %s613 = smul.addr %s612, 16
          %s614 = scalar_lea.vmem [#allocation9], %s613
          %615 = dma.done %s611, 256
        $region68: #{tpu_custom_call.1} parent=63 // pred_fallthru
          _
      $region64: #{tpu_custom_call.1} parent=5 // pred_fallthru
        _
    $region6: #{tpu_custom_call.1} parent=1 // loop_footer
      %s23 = sadd.s32 1, %s19
    $region7: #{tpu_custom_call.1} parent=1 // loop_footer_branch
      %18 = sbr.rel target = $region3
    $region8: #{tpu_custom_call.1} parent=1 // loop_exit
      _
    %616 = vsyncpa [#allocation4], 1
    %s617 = scalar_lea.sflag [#allocation4], 1
    %618 = vsyncpa %s617, 1
    %619 = vsyncpa [#allocation7], 1
    %s620 = scalar_lea.sflag [#allocation7], 1
    %621 = vsyncpa %s620, 1
    %622 = vsyncpa [#allocation5], 1
    %s623 = scalar_lea.sflag [#allocation5], 1
    %624 = vsyncpa %s623, 1

</llo_original>
